<compile_context>
chip_gen: v7x
topology: tpu7x:2x2x1
jax: 0.10.0
libtpu: 0.0.40
codegen_flags: <defaults>
</compile_context>

<pallas_src>
import functools

import jax
import jax.numpy as jnp
from jax import lax
from jax.experimental import pallas as pl
from jax.experimental.pallas import tpu as pltpu

_LANE = 128


# ----------------------------------------------------------------------------
# Small helpers: padded-footprint accounting & generation-aware VMEM plan
# ----------------------------------------------------------------------------
def _cdiv(a, b):
    return -(-a // b)


def _round_up(x, m):
    return ((x + m - 1) // m) * m


def _sublane(dtype):
    """Second-to-last-dim tiling granularity on TPU for a dtype."""
    return {4: 8, 2: 16, 1: 32}.get(jnp.dtype(dtype).itemsize, 8)


def _padded_block_bytes(bb, rb, hw, dtype):
    """VMEM bytes of one (bb, rb, hw) block after lane/sublane padding."""
    it = jnp.dtype(dtype).itemsize
    return bb * _round_up(rb, _sublane(dtype)) * _round_up(hw, _LANE) * it


def _stream_block_bytes(bb, rb, hw, o_dtype, t_dtype, m_dtype):
    return (_padded_block_bytes(bb, rb, hw, o_dtype)
            + _padded_block_bytes(bb, rb, hw, t_dtype)
            + _padded_block_bytes(bb, rb, hw, m_dtype))


def _vmem_plan():
    """(block budget, cap for vmem_limit_bytes), generation aware.

    v5e/v6e: 128 MiB physical VMEM -> large blocks amortize the ~0.35 us/step
    pipeline overhead.  v7x: 64 MiB per TensorCore -> keep the padded
    double-buffered footprint around 24 MiB.
    """
    try:
        cap = int(pltpu.get_tpu_info().vmem_capacity_bytes)
    except Exception:          # info unavailable -> assume the smallest (v7x)
        cap = 64 << 20
    if cap >= (96 << 20):      # v5e / v6e class
        return 48 << 20, max(32 << 20, cap - (24 << 20))
    return 24 << 20, max(24 << 20, cap - (16 << 20))   # v7x class


@functools.lru_cache(maxsize=None)
def _bool_inputs_supported():
    """Probe once whether this jax/Mosaic accepts bool-dtype pallas inputs
    (1 B/elem mask stream with no astype pre-pass); fall back to int8 if not."""
    def probe(m_ref, o_ref):
        m = m_ref[...]
        o_ref[...] = jnp.where(m, 1.0, 0.0) + m.astype(jnp.float32)

    try:
        x = jnp.zeros((8, _LANE), dtype=jnp.bool_)
        out = pl.pallas_call(
            probe, out_shape=jax.ShapeDtypeStruct((8, _LANE), jnp.float32))(x)
        jax.block_until_ready(out)
        return True
    except Exception:
        return False


def _choose_tiles(B, R, HW, o_dtype, t_dtype, m_dtype, budget):
    """Pick (batch block BB, row block RB).

    * blocks as large as the padded double-buffered footprint allows
    * BB always divides B (no batch-tail masking needed in the kernel)
    * RB is the whole row slab when it fits, otherwise a multiple of 32
      (dense f32/bf16/int8 sublane tiles); ragged row tails masked in-kernel
    * the grid is forced to have >= 2 steps so v7x Megacore can shard it
    """
    def dbuf_bytes(bb, rb):
        streams = 2 * _stream_block_bytes(bb, rb, HW, o_dtype, t_dtype, m_dtype)
        weight = 2 * _padded_block_bytes(1, rb, HW, jnp.float32)
        return streams + weight

    # Row block.
    if dbuf_bytes(1, R) <= budget:
        RB = R
    else:
        chunk = dbuf_bytes(1, 32)                   # exact for multiples of 32
        RB = 32 * int(max(1, budget // max(chunk, 1)))
        while RB > 32 and dbuf_bytes(1, RB) > budget:
            RB -= 32
        RB = min(RB, _round_up(R, 32))
        if RB >= R:
            RB = R

    # Batch block: largest divisor of B whose footprint still fits.
    w_bytes = 2 * _padded_block_bytes(1, RB, HW, jnp.float32)
    per_batch = 2 * _stream_block_bytes(1, RB, HW, o_dtype, t_dtype, m_dtype)
    bb_max = int(max(1, min(B, (budget - w_bytes) // max(per_batch, 1))))
    BB = max(d for d in range(1, bb_max + 1) if B % d == 0)

    # Megacore (v7x): guarantee >= 2 grid steps along a parallel axis.  Costs
    # one extra ~0.35 us pipeline step elsewhere; free vs. an idle TensorCore.
    if _cdiv(B, BB) * _cdiv(R, RB) < 2:
        if B >= 2:
            half = _cdiv(B, 2)
            BB = max(d for d in range(1, half + 1) if B % d == 0)
        elif R >= 16:
            RB = _round_up(_cdiv(R, 2), 8)
    return BB, RB


# ----------------------------------------------------------------------------
# Pallas kernel: per-grid-cell partial sums
# ----------------------------------------------------------------------------
def _wmse_kernel(o_ref, t_ref, m_ref, w_ref, out_ref, *, R, RB, mask_row_tail):
    """Blocks:
         o_ref/t_ref : (BB, RB, HW) output/target, native dtype (upcast in-reg)
         m_ref       : (BB, RB, HW) mask, bool or int8 (1 B/elem stream)
         w_ref       : (RB, HW)     f32 combined batch-free weight table
         out_ref     : (1, 1, 1, 128) lane0=weighted sum, lane1=mask count,
                       lane2=NaN(output) count, rest zero.
    """
    o = o_ref[...].astype(jnp.float32)
    t = t_ref[...].astype(jnp.float32)
    m = m_ref[...]
    w = w_ref[...].astype(jnp.float32)

    valid = m if m.dtype == jnp.bool_ else (m != 0)
    nan_mask = jnp.isnan(o)

    if mask_row_tail:
        # Ragged row tail: rows past R in the last block are garbage reads —
        # keep them out of every reduction.
        r_idx = (lax.broadcasted_iota(jnp.int32, (RB, 1), 0)
                 + pl.program_id(0) * RB)
        rows_ok = (r_idx < R)[None, :, :]            # (1, RB, 1)
        valid = valid & rows_ok
        nan_mask = nan_mask & rows_ok

    diff = o - t
    # select() semantics: NaN/Inf in masked-out (or out-of-bounds) elements
    # cannot poison the accumulated sum.
    contrib = jnp.where(valid, w[None, :, :] * (diff * diff), 0.0)

    wsum = jnp.sum(contrib)
    cnt = jnp.sum(valid.astype(jnp.float32))
    nan_cnt = jnp.sum(nan_mask.astype(jnp.float32))

    lane = lax.broadcasted_iota(jnp.int32, (1, 1, 1, 128), 3)
    out_ref[...] = jnp.where(lane == 0, wsum,
                     jnp.where(lane == 1, cnt,
                       jnp.where(lane == 2, nan_cnt, 0.0)))


def _weighted_masked_sums(o3, t3, m3, w2):
    """Returns (sum(mask*w*(o-t)^2), sum(mask), count(isnan(o)))."""
    B, R, HW = o3.shape
    budget, limit_cap = _vmem_plan()
    BB, RB = _choose_tiles(B, R, HW, o3.dtype, t3.dtype, m3.dtype, budget)
    nb, nr = _cdiv(B, BB), _cdiv(R, RB)              # BB always divides B

    kernel = functools.partial(_wmse_kernel, R=R, RB=RB,
                               mask_row_tail=(nr * RB != R))

    # Grid = (row blocks, batch blocks): batch is the *inner* axis, so the
    # (RB, HW) weight block index only depends on the outer axis and Pallas
    # skips re-DMAing it between consecutive steps.
    data_spec = pl.BlockSpec((BB, RB, HW), lambda j, i: (i, j, 0))
    w_spec = pl.BlockSpec((RB, HW), lambda j, i: (j, 0))
    out_spec = pl.BlockSpec((1, 1, 1, 128), lambda j, i: (j, i, 0, 0))

    # Explicit, padding-aware VMEM plan (225->256 lanes, 8/16/32 sublanes).
    footprint = (2 * _stream_block_bytes(BB, RB, HW, o3.dtype, t3.dtype, m3.dtype)
                 + 2 * _padded_block_bytes(1, RB, HW, w2.dtype)
                 + 2 * 8 * _LANE * 4)
    vmem_limit = int(min(limit_cap, max(32 << 20, footprint + (4 << 20))))

    n = B * R * HW
    bytes_accessed = (n * (jnp.dtype(o3.dtype).itemsize
                           + jnp.dtype(t3.dtype).itemsize
                           + jnp.dtype(m3.dtype).itemsize)
                      + R * HW * 4 + nr * nb * _LANE * 4)
    cost = pl.CostEstimate(flops=5 * n, transcendentals=0,
                           bytes_accessed=int(bytes_accessed))

    partials = pl.pallas_call(
        kernel,
        out_shape=jax.ShapeDtypeStruct((nr, nb, 1, 128), jnp.float32),
        grid_spec=pltpu.PrefetchScalarGridSpec(
            num_scalar_prefetch=0,
            grid=(nr, nb),
            in_specs=[data_spec, data_spec, data_spec, w_spec],
            out_specs=out_spec,
        ),
        compiler_params=pltpu.CompilerParams(
            dimension_semantics=("parallel", "parallel"),
            vmem_limit_bytes=vmem_limit),
        cost_estimate=cost,
        # TODO(synk): on v7x, bump the three data streams to
        # pipeline_mode=pl.Buffered(3) if an xprof trace shows DMA-wait
        # bubbles at grid-step boundaries.
    )(o3, t3, m3, w2)

    wsum = jnp.sum(partials[:, :, 0, 0])
    cnt = jnp.sum(partials[:, :, 0, 1])
    nan_cnt = jnp.sum(partials[:, :, 0, 2])
    return wsum, cnt, nan_cnt


# ----------------------------------------------------------------------------
# Loss module
# ----------------------------------------------------------------------------
class WeightedMaskedMSELossPallas:
    def __init__(self, spatial_size=(15, 15), frames=11,
                 sparsity_weight=0.01, sparsity_target=0.05):
        self.spatial_size = tuple(spatial_size)
        self.frames = frames
        self.sparsity_weight = sparsity_weight
        self.sparsity_target = sparsity_target
        self.weight_map = self._create_weight_map()          # (H, W), static
        self._weight_cache = {}                               # (F, I) -> (F*I, H*W)

    def _create_weight_map(self):
        h, w = self.spatial_size
        ci, cj = h // 2, w // 2
        ii = jnp.arange(h)[:, None]
        jj = jnp.arange(w)[None, :]
        dist = jnp.maximum(jnp.abs(ii - ci), jnp.abs(jj - cj))
        far = 0.01 * jnp.power(0.1, (dist - 1).astype(jnp.float32))
        return jnp.where(dist == 0, 1.0, far).astype(jnp.float32)

    @staticmethod
    def _create_temporal_weights(frames):
        center = frames // 2
        dist = jnp.abs(jnp.arange(frames) - center).astype(jnp.float32)
        return jnp.power(0.1, dist).astype(jnp.float32)

    def _combined_weight_table(self, frames, indices):
        """Batch-free (F*I, H*W) table, reproducing torch's broadcast followed
        by the contiguous `.view(B, F, I, H, W)` memory reinterpretation."""
        key = (int(frames), int(indices))
        if key not in self._weight_cache:
            F, I = key
            H, W = self.spatial_size
            temporal = self._create_temporal_weights(F)
            comb = (temporal[:, None, None, None]
                    * self.weight_map[None, :, :, None])       # (F, H, W, 1)
            comb = jnp.broadcast_to(comb, (F, H, W, I))         # (F, H, W, I)
            # Raw contiguous (H, W, I) memory re-viewed as (I, H, W) — exactly
            # like torch's .view on the contiguous product tensor.
            comb = comb.reshape(F * I, H * W).astype(jnp.float32)
            self._weight_cache[key] = comb
        return self._weight_cache[key]

    def sparsity_penalty(self, activations):
        # Tiny reduction -> plain JAX (cheaper than a dedicated kernel launch).
        rho = self.sparsity_target
        am = jnp.mean(activations.astype(jnp.float32), axis=0)
        kl = (rho * jnp.log(rho / am + 1e-10)
              + (1.0 - rho) * jnp.log((1.0 - rho) / (1.0 - am + 1e-10)))
        return jnp.sum(kl)

    def __call__(self, output, target, mask, latent_activations=None):
        B, F, I, H, W = output.shape
        R, HW = F * I, H * W
        w_tbl = self._combined_weight_table(F, I)

        # Pure reshapes: output/target stream in their NATIVE dtype, the mask
        # streams as a 1-byte bool — no wrapper-side astype / broadcast passes
        # over the big arrays.
        o3 = output.reshape(B, R, HW)
        t3 = target.reshape(B, R, HW)
        m3 = mask.reshape(B, R, HW)
        if m3.dtype != jnp.bool_ and jnp.dtype(m3.dtype).itemsize != 1:
            m3 = m3 != 0                      # collapse wide masks to 1 B/elem
        if m3.dtype == jnp.bool_ and not _bool_inputs_supported():
            m3 = m3.astype(jnp.int8)          # fallback for older Mosaic only

        wsum, cnt, nan_cnt = _weighted_masked_sums(o3, t3, m3, w_tbl)

        weighted_loss = wsum / jnp.maximum(cnt, 1.0)
        total = weighted_loss
        if latent_activations is not None:
            total = weighted_loss + self.sparsity_weight * self.sparsity_penalty(
                latent_activations)

        # torch returns 0.0 (skipping the KL term too) if output has NaNs or
        # the mask is empty.
        # TODO(synk): torch's diagnostic prints are dropped; value semantics kept.
        invalid = (nan_cnt > 0.0) | (cnt == 0.0)
        return jnp.where(invalid, jnp.float32(0.0), total)


# ----------------------------------------------------------------------------
# Pure-JAX reference (mirrors the torch forward) for a sanity check
# ----------------------------------------------------------------------------
def _reference(loss_mod, output, target, mask, latent):
    B, F, I, H, W = output.shape
    spatial = loss_mod.weight_map
    temporal = loss_mod._create_temporal_weights(F)
    s5 = jnp.broadcast_to(spatial[None, None, :, :, None], (B, F, H, W, I))
    t5 = jnp.broadcast_to(temporal[None, :, None, None, None], (B, F, H, W, I))
    weights = (s5 * t5).reshape(B, F, I, H, W)          # torch .view quirk
    cnt = jnp.sum(mask)
    wl = jnp.sum(jnp.where(mask, weights * (output - target) ** 2, 0.0)) / cnt
    rho = loss_mod.sparsity_target
    am = jnp.mean(latent, axis=0)
    kl = (rho * jnp.log(rho / am + 1e-10)
          + (1 - rho) * jnp.log((1 - rho) / (1 - am + 1e-10)))
    return wl + loss_mod.sparsity_weight * jnp.sum(kl)


if __name__ == "__main__":
    key = jax.random.PRNGKey(0)
    k1, k2, k3, k4 = jax.random.split(key, 4)

    B, F, I, H, W = 2, 11, 4, 15, 15          # (batch, frames, indices, h, w)
    output = jax.random.normal(k1, (B, F, I, H, W), dtype=jnp.float32)
    target = jax.random.normal(k2, (B, F, I, H, W), dtype=jnp.float32)
    mask = jax.random.bernoulli(k3, 0.5, (B, F, I, H, W))
    latent = jax.random.uniform(k4, (2, 128), minval=0.01, maxval=0.99,
                                dtype=jnp.float32)

    loss_mod = WeightedMaskedMSELossPallas(spatial_size=(H, W), frames=F)

    loss = jax.block_until_ready(
        loss_mod(output, target, mask, latent_activations=latent))
    ref = jax.block_until_ready(_reference(loss_mod, output, target, mask, latent))
    assert jnp.allclose(loss, ref, rtol=1e-4, atol=1e-5), (loss, ref)

    print("KERNEL_OK")
</pallas_src>

<mosaic_0001>
module attributes {stable_mosaic.version = 11 : i64} {
  func.func @probe(%arg0: memref<8x128xi32, #tpu.memory_space<vmem>>, %arg1: memref<8x128xf32, #tpu.memory_space<vmem>>) attributes {dimension_semantics = [], scalar_prefetch = 0 : i64, scratch_operands = 0 : i64, tpu.core_type = #tpu.core_type<tc>} {
    %c0 = arith.constant 0 : index
    %c0_0 = arith.constant 0 : index
    %0 = vector.load %arg0[%c0, %c0_0] : memref<8x128xi32, #tpu.memory_space<vmem>>, vector<8x128xi32>
    %cst = arith.constant dense<0> : vector<8x128xi32>
    %1 = arith.cmpi ne, %0, %cst : vector<8x128xi32>
    %cst_1 = arith.constant 1.000000e+00 : f32
    %cst_2 = arith.constant 0.000000e+00 : f32
    %2 = vector.broadcast %cst_1 : f32 to vector<8x128xf32>
    %3 = vector.broadcast %cst_2 : f32 to vector<8x128xf32>
    %4 = arith.select %1, %2, %3 : vector<8x128xi1>, vector<8x128xf32>
    %5 = arith.extui %1 : vector<8x128xi1> to vector<8x128xi32>
    %6 = arith.sitofp %5 : vector<8x128xi32> to vector<8x128xf32>
    %7 = arith.addf %4, %6 : vector<8x128xf32>
    %c0_3 = arith.constant 0 : index
    %c0_4 = arith.constant 0 : index
    %8 = vector.load %arg1[%c0_3, %c0_4] : memref<8x128xf32, #tpu.memory_space<vmem>>, vector<8x128xf32>
    tpu.vector_store %arg1[%c0_3, %c0_4], %7 {strides = array<i32>} : memref<8x128xf32, #tpu.memory_space<vmem>>, vector<8x128xf32>,
    return
  }
}

module attributes {stable_mosaic.version = 11 : i64} {
  func.func @_wmse_kernel(%arg0: i32, %arg1: i32, %arg2: memref<1x44x225xf32, #tpu.memory_space<vmem>>, %arg3: memref<1x44x225xf32, #tpu.memory_space<vmem>>, %arg4: memref<1x44x225xi8, #tpu.memory_space<vmem>>, %arg5: memref<44x225xf32, #tpu.memory_space<vmem>>, %arg6: memref<1x1x1x128xf32, #tpu.memory_space<vmem>>) attributes {dimension_semantics = [#tpu.dimension_semantics<parallel>, #tpu.dimension_semantics<parallel>], iteration_bounds = array<i64: 1, 2>, scalar_prefetch = 0 : i64, scratch_operands = 0 : i64, tpu.core_type = #tpu.core_type<tc>, window_params = [{transform_indices = @transform_0, window_bounds = array<i64: 1, 44, 225>}, {transform_indices = @transform_1, window_bounds = array<i64: 1, 44, 225>}, {transform_indices = @transform_2, window_bounds = array<i64: 1, 44, 225>}, {transform_indices = @transform_3, window_bounds = array<i64: 44, 225>}, {transform_indices = @transform_4, window_bounds = array<i64: 1, 1, 1, 128>}]} {
    %c0 = arith.constant 0 : index
    %c0_0 = arith.constant 0 : index
    %c0_1 = arith.constant 0 : index
    %0 = vector.load %arg2[%c0, %c0_0, %c0_1] : memref<1x44x225xf32, #tpu.memory_space<vmem>>, vector<1x44x225xf32>
    %c0_2 = arith.constant 0 : index
    %c0_3 = arith.constant 0 : index
    %c0_4 = arith.constant 0 : index
    %1 = vector.load %arg3[%c0_2, %c0_3, %c0_4] : memref<1x44x225xf32, #tpu.memory_space<vmem>>, vector<1x44x225xf32>
    %c0_5 = arith.constant 0 : index
    %c0_6 = arith.constant 0 : index
    %c0_7 = arith.constant 0 : index
    %2 = vector.load %arg4[%c0_5, %c0_6, %c0_7] : memref<1x44x225xi8, #tpu.memory_space<vmem>>, vector<1x44x225xi8>
    %c0_8 = arith.constant 0 : index
    %c0_9 = arith.constant 0 : index
    %3 = vector.load %arg5[%c0_8, %c0_9] : memref<44x225xf32, #tpu.memory_space<vmem>>, vector<44x225xf32>
    %c0_i8 = arith.constant 0 : i8
    %4 = vector.broadcast %c0_i8 : i8 to vector<1x44x225xi8>
    %5 = arith.cmpi ne, %2, %4 : vector<1x44x225xi8>
    %6 = arith.cmpf one, %0, %0 : vector<1x44x225xf32>
    %7 = arith.subf %0, %1 : vector<1x44x225xf32>
    %8 = vector.shape_cast %3 : vector<44x225xf32> to vector<1x44x225xf32>
    %9 = arith.mulf %7, %7 : vector<1x44x225xf32>
    %10 = arith.mulf %8, %9 : vector<1x44x225xf32>
    %cst = arith.constant 0.000000e+00 : f32
    %11 = vector.broadcast %cst : f32 to vector<1x44x225xf32>
    %12 = arith.select %5, %10, %11 : vector<1x44x225xi1>, vector<1x44x225xf32>
    %13 = vector.shape_cast %12 : vector<1x44x225xf32> to vector<1x1x44x225xf32>
    %cst_10 = arith.constant dense<0.000000e+00> : vector<1xf32>
    %14 = vector.multi_reduction <add>, %13, %cst_10 [1, 2, 3] : vector<1x1x44x225xf32> to vector<1xf32>
    %15 = vector.shape_cast %14 : vector<1xf32> to vector<1x1x1x1xf32>
    %16 = vector.extract %15[0, 0, 0, 0] : f32 from vector<1x1x1x1xf32>
    %17 = arith.extui %5 : vector<1x44x225xi1> to vector<1x44x225xi32>
    %18 = arith.sitofp %17 : vector<1x44x225xi32> to vector<1x44x225xf32>
    %19 = vector.shape_cast %18 : vector<1x44x225xf32> to vector<1x1x44x225xf32>
    %cst_11 = arith.constant dense<0.000000e+00> : vector<1xf32>
    %20 = vector.multi_reduction <add>, %19, %cst_11 [1, 2, 3] : vector<1x1x44x225xf32> to vector<1xf32>
    %21 = vector.shape_cast %20 : vector<1xf32> to vector<1x1x1x1xf32>
    %22 = vector.extract %21[0, 0, 0, 0] : f32 from vector<1x1x1x1xf32>
    %23 = arith.extui %6 : vector<1x44x225xi1> to vector<1x44x225xi32>
    %24 = arith.sitofp %23 : vector<1x44x225xi32> to vector<1x44x225xf32>
    %25 = vector.shape_cast %24 : vector<1x44x225xf32> to vector<1x1x44x225xf32>
    %cst_12 = arith.constant dense<0.000000e+00> : vector<1xf32>
    %26 = vector.multi_reduction <add>, %25, %cst_12 [1, 2, 3] : vector<1x1x44x225xf32> to vector<1xf32>
    %27 = vector.shape_cast %26 : vector<1xf32> to vector<1x1x1x1xf32>
    %28 = vector.extract %27[0, 0, 0, 0] : f32 from vector<1x1x1x1xf32>
    %29 = tpu.iota {dimensions = array<i32: 3>} : vector<1x1x1x128xi32>
    %c0_i32 = arith.constant 0 : i32
    %30 = vector.broadcast %c0_i32 : i32 to vector<1x1x1x128xi32>
    %31 = arith.cmpi eq, %29, %30 : vector<1x1x1x128xi32>
    %c1_i32 = arith.constant 1 : i32
    %32 = vector.broadcast %c1_i32 : i32 to vector<1x1x1x128xi32>
    %33 = arith.cmpi eq, %29, %32 : vector<1x1x1x128xi32>
    %c2_i32 = arith.constant 2 : i32
    %34 = vector.broadcast %c2_i32 : i32 to vector<1x1x1x128xi32>
    %35 = arith.cmpi eq, %29, %34 : vector<1x1x1x128xi32>
    %cst_13 = arith.constant 0.000000e+00 : f32
    %36 = vector.broadcast %28 : f32 to vector<1x1x1x128xf32>
    %37 = vector.broadcast %cst_13 : f32 to vector<1x1x1x128xf32>
    %38 = arith.select %35, %36, %37 : vector<1x1x1x128xi1>, vector<1x1x1x128xf32>
    %39 = vector.broadcast %22 : f32 to vector<1x1x1x128xf32>
    %40 = arith.select %33, %39, %38 : vector<1x1x1x128xi1>, vector<1x1x1x128xf32>
    %41 = vector.broadcast %16 : f32 to vector<1x1x1x128xf32>
    %42 = arith.select %31, %41, %40 : vector<1x1x1x128xi1>, vector<1x1x1x128xf32>
    %c0_14 = arith.constant 0 : index
    %c0_15 = arith.constant 0 : index
    %c0_16 = arith.constant 0 : index
    %c0_17 = arith.constant 0 : index
    %43 = vector.load %arg6[%c0_14, %c0_15, %c0_16, %c0_17] : memref<1x1x1x128xf32, #tpu.memory_space<vmem>>, vector<1x1x1x128xf32>
    tpu.vector_store %arg6[%c0_14, %c0_15, %c0_16, %c0_17], %42 {strides = array<i32>} : memref<1x1x1x128xf32, #tpu.memory_space<vmem>>, vector<1x1x1x128xf32>,
    return
  }
  func.func @transform_0(%arg0: i32, %arg1: i32) -> (i32, i32, i32) {
    %c0_i32 = arith.constant 0 : i32
    %c0_i32_0 = arith.constant 0 : i32
    return %arg1, %arg0, %c0_i32 : i32, i32, i32
  }
  func.func @transform_1(%arg0: i32, %arg1: i32) -> (i32, i32, i32) {
    %c0_i32 = arith.constant 0 : i32
    %c0_i32_0 = arith.constant 0 : i32
    return %arg1, %arg0, %c0_i32 : i32, i32, i32
  }
  func.func @transform_2(%arg0: i32, %arg1: i32) -> (i32, i32, i32) {
    %c0_i32 = arith.constant 0 : i32
    %c0_i32_0 = arith.constant 0 : i32
    return %arg1, %arg0, %c0_i32 : i32, i32, i32
  }
  func.func @transform_3(%arg0: i32, %arg1: i32) -> (i32, i32) {
    %c0_i32 = arith.constant 0 : i32
    %c0_i32_0 = arith.constant 0 : i32
    return %arg0, %c0_i32 : i32, i32
  }
  func.func @transform_4(%arg0: i32, %arg1: i32) -> (i32, i32, i32, i32) {
    %c0_i32 = arith.constant 0 : i32
    %c0_i32_0 = arith.constant 0 : i32
    %c0_i32_1 = arith.constant 0 : i32
    return %arg0, %arg1, %c0_i32, %c0_i32_0 : i32, i32, i32, i32
  }
}

</mosaic_0001>

<llo_original>
// kernel: tpu_custom_call.1
$region0: #{tpu_custom_call.1}
  #allocation0 [shape = 'u32[]', space=smem, size = 0x4, offset = 0x4, fixed_abs, tag = 'smem constant byte address 0x4 - core index']
  #allocation1 [shape = 'u32[144,128]{1,0:T(1,128)}', space=vmem, size = 0x12000, scoped, tag = 'internal scratch']
  %s0 = inlined_call_operand.vmem [shape: s32[8,128], index: 0, kind: input, shape index: {}]
  %s1 = inlined_call_operand.hbm [shape: f32[8,128], index: 1, kind: output, shape index: {}]
  %s2 = sld [smem:[#allocation0]]
  $region14: #{tpu_custom_call.1} parent=0
    _
  %s4 = ssub.s32 1, %s2
  %s5 = scalar_select 0, %s4, %s2
  $region1: #{tpu_custom_call.1} parent=0
    #allocation2 [shape = 'u8[4096]{0}', space=vmem, size = 0x1000, scoped, tag = 'output window, operand 0, single buffered']
    #allocation3 [shape = 's32[1]{0}', space=sflag, size = 0x4, scoped, tag = 'scoped memory for tpu_custom_call.1']
    %6 = vsyncpa [#allocation3], 0
    // Predicated region
    $region2: #{tpu_custom_call.1} parent=1 // pred_check
      _
    $region3: #{tpu_custom_call.1} parent=1 // pred_check_branch
      %8 = sbr.rel (0) target = $region5
    $region4: #{tpu_custom_call.1} parent=1 // pred_region
      _
    $region5: #{tpu_custom_call.1} parent=1 // pred_fallthru
      _
    %v9 = vld [vmem:[%s0] sm:$0xff]
    %vm10 = vcmp.ne.s32.totalorder %v9, 0
    %v11 = vsel %vm10, 1.0, 0.0
    %v12 = vsel %vm10, 1, 0
    %v13 = vcvt.s32.f32 %v12
    %v14 = vadd.f32 %v11, %v13
    %15 = vst [vmem:[#allocation2] sm:$0xff] %v14
    // Predicated region
    $region6: #{tpu_custom_call.1} parent=1 // pred_check
      _
    $region7: #{tpu_custom_call.1} parent=1 // pred_check_branch
      %17 = sbr.rel (0) target = $region9
    $region8: #{tpu_custom_call.1} parent=1 // pred_region
      %s19 = ssub.s32 128, 128
      %20 = vsyncadd [#allocation3], %s19
      %s22 = sshll.u32 [#allocation2], 4
      %s23 = int_to_ptr.vmem [resolvable:$true] %s22
      %25 = dma.vmem_to_hbm [thread:$0]  %s23, 128, %s1, [#allocation3]
    $region9: #{tpu_custom_call.1} parent=1 // pred_fallthru
      _
    // Predicated region
    $region10: #{tpu_custom_call.1} parent=1 // pred_check
      _
    $region11: #{tpu_custom_call.1} parent=1 // pred_check_branch
      %27 = sbr.rel (0) target = $region13
    $region12: #{tpu_custom_call.1} parent=1 // pred_region
      %28 = dma.done [#allocation3], 128
    $region13: #{tpu_custom_call.1} parent=1 // pred_fallthru
      _
    %29 = vsyncpa [#allocation3], 1

// kernel: tpu_custom_call.1
$region0: #{tpu_custom_call.1}
  #allocation0 [shape = 'u32[]', space=smem, size = 0x4, offset = 0x4, fixed_abs, tag = 'smem constant byte address 0x4 - core index']
  #allocation1 [shape = 'u32[144,128]{1,0:T(1,128)}', space=vmem, size = 0x12000, scoped, tag = 'internal scratch']
  %s0 = inlined_call_operand.vmem [shape: f32[2,44,225], index: 0, kind: input, shape index: {}]
  %s1 = inlined_call_operand.vmem [shape: f32[2,44,225], index: 1, kind: input, shape index: {}]
  %s2 = inlined_call_operand.vmem [shape: s8[2,44,225], index: 2, kind: input, shape index: {}]
  %s3 = inlined_call_operand.vmem [shape: f32[44,225], index: 3, kind: input, shape index: {}]
  %s4 = inlined_call_operand.hbm [shape: f32[1,2,1,128], index: 4, kind: output, shape index: {}]
  %s5 = sld [smem:[#allocation0]]
  $region49: #{tpu_custom_call.1} parent=0
    _
  %s7 = ssub.s32 1, %s5
  %s8 = scalar_select 0, %s7, %s5
  $region1: #{tpu_custom_call.1} parent=0
    #allocation2 [shape = 'u8[1024]{0}', space=vmem, size = 0x400, scoped, tag = 'output window, operand 0']
    #allocation3 [shape = 's32[2]{0}', space=sflag, size = 0x8, scoped, tag = 'scoped memory for tpu_custom_call.1']
    %9 = vsyncpa [#allocation3], 0
    %s10 = scalar_lea.sflag [#allocation3], 1
    %11 = vsyncpa %s10, 0
    loop: start=0, step=1, limit=4
    $region2: #{tpu_custom_call.1} parent=1 // loop_pre_header
      _
    $region3: #{tpu_custom_call.1} parent=1 // loop_header
      %s13 = sphi 0, %s17
      %p14 = scmp.ge.s32.totalorder %s13, 4
      %s20 = sphi 0, %s32
      %s21 = sphi 0, %s28
      %s22 = sphi 0, %s20
      %s23 = sphi 0, %s21
      %s24 = sphi 0, %s22
      %s25 = sphi 0, %s23
      %s37 = sphi 0, %s39
      %s40 = sphi 0, %s37
      %s41 = sphi 0, %s40
      %s57 = sphi 0, %s41
      %s65 = sphi 0, %s67
      %s68 = sphi 0, %s65
      %s69 = sphi 0, %s68
      %s85 = sphi 0, %s69
      %s93 = sphi 0, %s95
      %s96 = sphi 0, %s93
      %s97 = sphi 0, %s96
      %s113 = sphi 0, %s97
      %s119 = sphi 0, %s121
      %s122 = sphi 0, %s119
      %s123 = sphi 0, %s122
      %s139 = sphi 0, %s123
      %s147 = sphi 0, %s149
      %s150 = sphi 0, %s147
      %s151 = sphi 0, %s150
      %s167 = sphi 0, %s151
    $region4: #{tpu_custom_call.1} parent=1 // loop_header_branch
      %16 = sbr.rel (%p14) target = $region8
    $region5: #{tpu_custom_call.1} parent=1 // loop_body
      %s18 = ssub.s32 %s13, 1
      %s19 = ssub.s32 %s13, 2
      %s26 = sadd.s32 1, %s21
      %p27 = scmp.ge.s32.totalorder %s26, 2
      %s28 = scalar_select %p27, 0, %s26
      %s29 = sadd.s32 1, %s20
      %s30 = scalar_select %p27, %s29, %s20
      %p31 = scmp.ge.s32.totalorder %s30, 1
      %s32 = scalar_select %p31, 0, %s30
      %s33 = ssub.s32 %s21, %s28
      %s34 = ssub.s32 %s20, %s32
      %s35 = sor.u32 %s33, %s34
      %p36 = scmp.eq.s32.totalorder %s35, 0
      %s38 = sadd.s32 %s37, 1
      %s39 = scalar_select %p36, %s37, %s38
      %p42 = pneg %p36
      %p43 = scmp.eq.s32.totalorder %s13, 1
      %p44 = por %p42, %p43
      %p45 = scmp.ne.s32.totalorder %s37, %s40
      %p46 = scmp.eq.s32.totalorder %s13, 0
      %p47 = por %p45, %p46
      %p48 = scmp.ne.s32.totalorder %s37, %s40
      %p49 = scmp.eq.s32.totalorder %s18, 1
      %p50 = por %p48, %p49
      %p51 = scmp.ne.s32.totalorder %s40, %s41
      %p52 = scmp.eq.s32.totalorder %s18, 0
      %p53 = por %p51, %p52
      %p54 = scmp.ne.s32.totalorder %s40, %s41
      %p55 = scmp.eq.s32.totalorder %s19, 1
      %p56 = por %p54, %p55
      %p58 = scmp.ne.s32.totalorder %s41, %s57
      %p59 = scmp.eq.s32.totalorder %s19, 0
      %p60 = por %p58, %p59
      %s61 = ssub.s32 %s21, %s28
      %s62 = ssub.s32 %s20, %s32
      %s63 = sor.u32 %s61, %s62
      %p64 = scmp.eq.s32.totalorder %s63, 0
      %s66 = sadd.s32 %s65, 1
      %s67 = scalar_select %p64, %s65, %s66
      %p70 = pneg %p64
      %p71 = scmp.eq.s32.totalorder %s13, 1
      %p72 = por %p70, %p71
      %p73 = scmp.ne.s32.totalorder %s65, %s68
      %p74 = scmp.eq.s32.totalorder %s13, 0
      %p75 = por %p73, %p74
      %p76 = scmp.ne.s32.totalorder %s65, %s68
      %p77 = scmp.eq.s32.totalorder %s18, 1
      %p78 = por %p76, %p77
      %p79 = scmp.ne.s32.totalorder %s68, %s69
      %p80 = scmp.eq.s32.totalorder %s18, 0
      %p81 = por %p79, %p80
      %p82 = scmp.ne.s32.totalorder %s68, %s69
      %p83 = scmp.eq.s32.totalorder %s19, 1
      %p84 = por %p82, %p83
      %p86 = scmp.ne.s32.totalorder %s69, %s85
      %p87 = scmp.eq.s32.totalorder %s19, 0
      %p88 = por %p86, %p87
      %s89 = ssub.s32 %s21, %s28
      %s90 = ssub.s32 %s20, %s32
      %s91 = sor.u32 %s89, %s90
      %p92 = scmp.eq.s32.totalorder %s91, 0
      %s94 = sadd.s32 %s93, 1
      %s95 = scalar_select %p92, %s93, %s94
      %p98 = pneg %p92
      %p99 = scmp.eq.s32.totalorder %s13, 1
      %p100 = por %p98, %p99
      %p101 = scmp.ne.s32.totalorder %s93, %s96
      %p102 = scmp.eq.s32.totalorder %s13, 0
      %p103 = por %p101, %p102
      %p104 = scmp.ne.s32.totalorder %s93, %s96
      %p105 = scmp.eq.s32.totalorder %s18, 1
      %p106 = por %p104, %p105
      %p107 = scmp.ne.s32.totalorder %s96, %s97
      %p108 = scmp.eq.s32.totalorder %s18, 0
      %p109 = por %p107, %p108
      %p110 = scmp.ne.s32.totalorder %s96, %s97
      %p111 = scmp.eq.s32.totalorder %s19, 1
      %p112 = por %p110, %p111
      %p114 = scmp.ne.s32.totalorder %s97, %s113
      %p115 = scmp.eq.s32.totalorder %s19, 0
      %p116 = por %p114, %p115
      %s117 = ssub.s32 %s20, %s32
      %p118 = scmp.eq.s32.totalorder %s117, 0
      %s120 = sadd.s32 %s119, 1
      %s121 = scalar_select %p118, %s119, %s120
      %p124 = pneg %p118
      %p125 = scmp.eq.s32.totalorder %s13, 1
      %p126 = por %p124, %p125
      %p127 = scmp.ne.s32.totalorder %s119, %s122
      %p128 = scmp.eq.s32.totalorder %s13, 0
      %p129 = por %p127, %p128
      %p130 = scmp.ne.s32.totalorder %s119, %s122
      %p131 = scmp.eq.s32.totalorder %s18, 1
      %p132 = por %p130, %p131
      %p133 = scmp.ne.s32.totalorder %s122, %s123
      %p134 = scmp.eq.s32.totalorder %s18, 0
      %p135 = por %p133, %p134
      %p136 = scmp.ne.s32.totalorder %s122, %s123
      %p137 = scmp.eq.s32.totalorder %s19, 1
      %p138 = por %p136, %p137
      %p140 = scmp.ne.s32.totalorder %s123, %s139
      %p141 = scmp.eq.s32.totalorder %s19, 0
      %p142 = por %p140, %p141
      %s143 = ssub.s32 %s20, %s32
      %s144 = ssub.s32 %s21, %s28
      %s145 = sor.u32 %s143, %s144
      %p146 = scmp.eq.s32.totalorder %s145, 0
      %s148 = sadd.s32 %s147, 1
      %s149 = scalar_select %p146, %s147, %s148
      %p152 = pneg %p146
      %p153 = scmp.eq.s32.totalorder %s13, 1
      %p154 = por %p152, %p153
      %p155 = scmp.ne.s32.totalorder %s147, %s150
      %p156 = scmp.eq.s32.totalorder %s13, 0
      %p157 = por %p155, %p156
      %p158 = scmp.ne.s32.totalorder %s147, %s150
      %p159 = scmp.eq.s32.totalorder %s18, 1
      %p160 = por %p158, %p159
      %p161 = scmp.ne.s32.totalorder %s150, %s151
      %p162 = scmp.eq.s32.totalorder %s18, 0
      %p163 = por %p161, %p162
      %p164 = scmp.ne.s32.totalorder %s150, %s151
      %p165 = scmp.eq.s32.totalorder %s19, 1
      %p166 = por %p164, %p165
      %p168 = scmp.ne.s32.totalorder %s151, %s167
      %p169 = scmp.eq.s32.totalorder %s19, 0
      %p170 = por %p168, %p169
      %p171 = scmp.le.s32.totalorder 1, %s13
      %p172 = scmp.lt.s32.totalorder %s13, 3
      %p173 = pnand %p171, %p172
      %p174 = pneg %p173
      // Predicated region
      $region9: #{tpu_custom_call.1} parent=5 // pred_check
        _
      $region10: #{tpu_custom_call.1} parent=5 // pred_check_branch
        %176 = sbr.rel (%p173) target = $region12
      $region11: #{tpu_custom_call.1} parent=5 // pred_region
        %s177 = ssub.s32 %s13, 1
        // Predicated region
        $region13: #{tpu_custom_call.1} parent=11 // pred_check
          %p178 = pneg %p135
        $region14: #{tpu_custom_call.1} parent=11 // pred_check_branch
          %180 = sbr.rel (%p178) target = $region16
        $region15: #{tpu_custom_call.1} parent=11 // pred_region
          %s181 = smul.u32 6, %s22
          %p182 = scmp.lt.s32.totalorder %s181, 5
          %s183 = scalar_select %p182, %s181, 5
          %s184 = smul.addr %s183, 2
          %s185 = smul.addr %s184, 8
          %s186 = scalar_lea.vmem %s3, %s185
          %s187 = smul.u32 6, %s22
        $region16: #{tpu_custom_call.1} parent=11 // pred_fallthru
          _
      $region12: #{tpu_custom_call.1} parent=5 // pred_fallthru
        _
      %p188 = scmp.lt.s32.totalorder %s13, 2
      // Predicated region
      $region17: #{tpu_custom_call.1} parent=5 // pred_check
        %p189 = pneg %p188
      $region18: #{tpu_custom_call.1} parent=5 // pred_check_branch
        %191 = sbr.rel (%p189) target = $region20
      $region19: #{tpu_custom_call.1} parent=5 // pred_region
        // Predicated region
        $region21: #{tpu_custom_call.1} parent=19 // pred_check
          %p192 = pneg %p47
        $region22: #{tpu_custom_call.1} parent=19 // pred_check_branch
          %194 = sbr.rel (%p192) target = $region24
        $region23: #{tpu_custom_call.1} parent=19 // pred_region
          %s195 = smul.u32 6, %s20
          %p196 = scmp.lt.s32.totalorder %s21, 1
          %s197 = scalar_select %p196, %s21, 1
          %p198 = scmp.lt.s32.totalorder %s195, 5
          %s199 = scalar_select %p198, %s195, 5
          %s200 = smul.addr %s199, 2
          %s201 = smul.addr %s197, 12
          %s202 = sadd.s32 %s200, %s201
          %s203 = smul.addr %s202, 8
          %s204 = scalar_lea.vmem %s0, %s203
          %s205 = smul.u32 6, %s20
        $region24: #{tpu_custom_call.1} parent=19 // pred_fallthru
          _
        // Predicated region
        $region25: #{tpu_custom_call.1} parent=19 // pred_check
          %p206 = pneg %p75
        $region26: #{tpu_custom_call.1} parent=19 // pred_check_branch
          %208 = sbr.rel (%p206) target = $region28
        $region27: #{tpu_custom_call.1} parent=19 // pred_region
          %s209 = smul.u32 6, %s20
          %p210 = scmp.lt.s32.totalorder %s21, 1
          %s211 = scalar_select %p210, %s21, 1
          %p212 = scmp.lt.s32.totalorder %s209, 5
          %s213 = scalar_select %p212, %s209, 5
          %s214 = smul.addr %s213, 2
          %s215 = smul.addr %s211, 12
          %s216 = sadd.s32 %s214, %s215
          %s217 = smul.addr %s216, 8
          %s218 = scalar_lea.vmem %s1, %s217
          %s219 = smul.u32 6, %s20
        $region28: #{tpu_custom_call.1} parent=19 // pred_fallthru
          _
        // Predicated region
        $region29: #{tpu_custom_call.1} parent=19 // pred_check
          %p220 = pneg %p103
        $region30: #{tpu_custom_call.1} parent=19 // pred_check_branch
          %222 = sbr.rel (%p220) target = $region32
        $region31: #{tpu_custom_call.1} parent=19 // pred_region
          %s223 = smul.u32 6, %s20
          %p224 = scmp.lt.s32.totalorder %s21, 1
          %s225 = scalar_select %p224, %s21, 1
          %p226 = scmp.lt.s32.totalorder %s223, 5
          %s227 = scalar_select %p226, %s223, 5
          %s228 = smul.addr %s227, 2
          %s229 = smul.addr %s225, 12
          %s230 = sadd.s32 %s228, %s229
          %s231 = smul.addr %s230, 2
          %s232 = scalar_lea.vmem %s2, %s231
          %s233 = smul.u32 6, %s20
        $region32: #{tpu_custom_call.1} parent=19 // pred_fallthru
          _
      $region20: #{tpu_custom_call.1} parent=5 // pred_fallthru
        _
      %p234 = scmp.le.s32.totalorder 1, %s13
      %p235 = scmp.lt.s32.totalorder %s13, 3
      %p236 = pnand %p234, %p235
      %p237 = pneg %p236
      // Predicated region
      $region33: #{tpu_custom_call.1} parent=5 // pred_check
        _
      $region34: #{tpu_custom_call.1} parent=5 // pred_check_branch
        %239 = sbr.rel (%p236) target = $region36
      $region35: #{tpu_custom_call.1} parent=5 // pred_region
        %s240 = ssub.s32 %s13, 1
        %s241 = smul.u32 6, %s22
        %p242 = scmp.lt.s32.totalorder %s23, 1
        %s243 = scalar_select %p242, %s23, 1
        %p244 = scmp.lt.s32.totalorder %s241, 5
        %s245 = scalar_select %p244, %s241, 5
        %s246 = smul.addr %s245, 2
        %s247 = smul.addr %s243, 12
        %s248 = sadd.s32 %s246, %s247
        %s249 = smul.addr %s248, 8
        %s250 = scalar_lea.vmem %s0, %s249
        %p251 = pneg %p53
        %p252 = pneg %p50
        %s253 = smul.u32 6, %s22
        %p254 = scmp.lt.s32.totalorder %s23, 1
        %s255 = scalar_select %p254, %s23, 1
        %p256 = scmp.lt.s32.totalorder %s253, 5
        %s257 = scalar_select %p256, %s253, 5
        %s258 = smul.addr %s257, 2
        %s259 = smul.addr %s255, 12
        %s260 = sadd.s32 %s258, %s259
        %s261 = smul.addr %s260, 8
        %s262 = scalar_lea.vmem %s1, %s261
        %p263 = pneg %p81
        %p264 = pneg %p78
        %s265 = smul.u32 6, %s22
        %p266 = scmp.lt.s32.totalorder %s23, 1
        %s267 = scalar_select %p266, %s23, 1
        %p268 = scmp.lt.s32.totalorder %s265, 5
        %s269 = scalar_select %p268, %s265, 5
        %s270 = smul.addr %s269, 2
        %s271 = smul.addr %s267, 12
        %s272 = sadd.s32 %s270, %s271
        %s273 = smul.addr %s272, 2
        %s274 = scalar_lea.vmem %s2, %s273
        %p275 = pneg %p109
        %p276 = pneg %p106
        %s277 = smul.u32 6, %s22
        %p278 = scmp.lt.s32.totalorder %s277, 5
        %s279 = scalar_select %p278, %s277, 5
        %s280 = smul.addr %s279, 2
        %s281 = smul.addr %s280, 8
        %s282 = scalar_lea.vmem %s3, %s281
        %p283 = pneg %p135
        %p284 = pneg %p132
        %p285 = pneg %p163
        %p286 = pneg %p160
        %s287 = sand.u32 %s150, 1
        %s288 = scalar_lea.sflag [#allocation3], %s287
        %s289 = sand.u32 %s150, 1
        %s290 = scalar_lea.vmem [#allocation2], %s289
        %s291 = smul.u32 6, %s22
        %p292 = scmp.lt.s32.totalorder %s23, 1
        %s293 = scalar_select %p292, %s23, 1
        %p294 = scmp.lt.s32.totalorder %s291, 5
        %s295 = scalar_select %p294, %s291, 5
        %s296 = smul.addr %s295, 2
        %s297 = smul.addr %s293, 12
        %s298 = sadd.s32 %s296, %s297
        %s299 = smul.addr %s298, 8
        %s300 = scalar_lea.vmem %s0, %s299
        %s301 = smul.u32 6, %s22
        %s302 = smul.u32 6, %s22
        %p303 = scmp.lt.s32.totalorder %s23, 1
        %s304 = scalar_select %p303, %s23, 1
        %p305 = scmp.lt.s32.totalorder %s302, 5
        %s306 = scalar_select %p305, %s302, 5
        %s307 = smul.addr %s306, 2
        %s308 = smul.addr %s304, 12
        %s309 = sadd.s32 %s307, %s308
        %s310 = smul.addr %s309, 8
        %s311 = scalar_lea.vmem %s1, %s310
        %s312 = smul.u32 6, %s22
        %s313 = smul.u32 6, %s22
        %p314 = scmp.lt.s32.totalorder %s23, 1
        %s315 = scalar_select %p314, %s23, 1
        %p316 = scmp.lt.s32.totalorder %s313, 5
        %s317 = scalar_select %p316, %s313, 5
        %s318 = smul.addr %s317, 2
        %s319 = smul.addr %s315, 12
        %s320 = sadd.s32 %s318, %s319
        %s321 = smul.addr %s320, 2
        %s322 = scalar_lea.vmem %s2, %s321
        %s323 = smul.u32 6, %s22
        %s324 = smul.u32 6, %s22
        %p325 = scmp.lt.s32.totalorder %s324, 5
        %s326 = scalar_select %p325, %s324, 5
        %s327 = smul.addr %s326, 2
        %s328 = smul.addr %s327, 8
        %s329 = scalar_lea.vmem %s3, %s328
        %s330 = smul.u32 6, %s22
        %v333 = vld [vmem:[%s300] sm:$0xff]
        %v334 = vld [vmem:[%s300 + $0x8] sm:$0xff]
        %v335 = vld [vmem:[%s300 + $0x10] sm:$0xff]
        %v336 = vld [vmem:[%s300 + $0x18] sm:$0xff]
        %v337 = vld [vmem:[%s300 + $0x20] sm:$0xff]
        %v338 = vld [vmem:[%s300 + $0x28] sm:$0xff]
        %v339 = vld [vmem:[%s300 + $0x30] sm:$0xff]
        %v340 = vld [vmem:[%s300 + $0x38] sm:$0xff]
        %v341 = vld [vmem:[%s300 + $0x40] sm:$0xff]
        %v342 = vld [vmem:[%s300 + $0x48] sm:$0xff]
        %v343 = vld [vmem:[%s300 + $0x50] sm:$0xf]
        %v344 = vld [vmem:[%s300 + $0x58] sm:$0xf]
        %v345 = vld [vmem:[%s311] sm:$0xff]
        %v346 = vld [vmem:[%s311 + $0x8] sm:$0xff]
        %v347 = vld [vmem:[%s311 + $0x10] sm:$0xff]
        %v348 = vld [vmem:[%s311 + $0x18] sm:$0xff]
        %v349 = vld [vmem:[%s311 + $0x20] sm:$0xff]
        %v350 = vld [vmem:[%s311 + $0x28] sm:$0xff]
        %v351 = vld [vmem:[%s311 + $0x30] sm:$0xff]
        %v352 = vld [vmem:[%s311 + $0x38] sm:$0xff]
        %v353 = vld [vmem:[%s311 + $0x40] sm:$0xff]
        %v354 = vld [vmem:[%s311 + $0x48] sm:$0xff]
        %v355 = vld [vmem:[%s311 + $0x50] sm:$0xf]
        %v356 = vld [vmem:[%s311 + $0x58] sm:$0xf]
        %v357 = vld [vmem:[%s322] sm:$0xf]
        %v358 = vld [vmem:[%s322 + $0x4] sm:$0xf]
        %v359 = vld [vmem:[%s322 + $0x8] sm:$0xf]
        %v360 = vld [vmem:[%s322 + $0xc] sm:$0xf]
        %v361 = vld [vmem:[%s322 + $0x10] sm:$0xf]
        %v362 = vld [vmem:[%s322 + $0x14] sm:$0x5]
        %v363 = vld [vmem:[%s329] sm:$0xff]
        %v364 = vld [vmem:[%s329 + $0x8] sm:$0xff]
        %v365 = vld [vmem:[%s329 + $0x10] sm:$0xff]
        %v366 = vld [vmem:[%s329 + $0x18] sm:$0xff]
        %v367 = vld [vmem:[%s329 + $0x20] sm:$0xff]
        %v368 = vld [vmem:[%s329 + $0x28] sm:$0xff]
        %v369 = vld [vmem:[%s329 + $0x30] sm:$0xff]
        %v370 = vld [vmem:[%s329 + $0x38] sm:$0xff]
        %v371 = vld [vmem:[%s329 + $0x40] sm:$0xff]
        %v372 = vld [vmem:[%s329 + $0x48] sm:$0xff]
        %v373 = vld [vmem:[%s329 + $0x50] sm:$0xf]
        %v374 = vld [vmem:[%s329 + $0x58] sm:$0xf]
        %vm375 = vnez %v357
        %vm376 = vnez %v358
        %vm377 = vnez %v359
        %vm378 = vnez %v360
        %vm379 = vnez %v361
        %vm380 = vnez %v362
        %vm381 = vcmp.ne.f32.partialorder %v333, %v333
        %vm382 = vcmp.ne.f32.partialorder %v334, %v334
        %vm383 = vcmp.ne.f32.partialorder %v335, %v335
        %vm384 = vcmp.ne.f32.partialorder %v336, %v336
        %vm385 = vcmp.ne.f32.partialorder %v337, %v337
        %vm386 = vcmp.ne.f32.partialorder %v338, %v338
        %vm387 = vcmp.ne.f32.partialorder %v339, %v339
        %vm388 = vcmp.ne.f32.partialorder %v340, %v340
        %vm389 = vcmp.ne.f32.partialorder %v341, %v341
        %vm390 = vcmp.ne.f32.partialorder %v342, %v342
        %vm391 = vcmp.ne.f32.partialorder %v343, %v343
        %vm392 = vcmp.ne.f32.partialorder %v344, %v344
        %v393 = vsub.f32 %v333, %v345
        %v394 = vsub.f32 %v334, %v346
        %v395 = vsub.f32 %v335, %v347
        %v396 = vsub.f32 %v336, %v348
        %v397 = vsub.f32 %v337, %v349
        %v398 = vsub.f32 %v338, %v350
        %v399 = vsub.f32 %v339, %v351
        %v400 = vsub.f32 %v340, %v352
        %v401 = vsub.f32 %v341, %v353
        %v402 = vsub.f32 %v342, %v354
        %v403 = vsub.f32 %v343, %v355
        %v404 = vsub.f32 %v344, %v356
        %v405 = vmul.f32 %v393, %v393
        %v406 = vmul.f32 %v394, %v394
        %v407 = vmul.f32 %v395, %v395
        %v408 = vmul.f32 %v396, %v396
        %v409 = vmul.f32 %v397, %v397
        %v410 = vmul.f32 %v398, %v398
        %v411 = vmul.f32 %v399, %v399
        %v412 = vmul.f32 %v400, %v400
        %v413 = vmul.f32 %v401, %v401
        %v414 = vmul.f32 %v402, %v402
        %v415 = vmul.f32 %v403, %v403
        %v416 = vmul.f32 %v404, %v404
        %v417 = vmul.f32 %v363, %v405
        %v418 = vmul.f32 %v364, %v406
        %v419 = vmul.f32 %v365, %v407
        %v420 = vmul.f32 %v366, %v408
        %v421 = vmul.f32 %v367, %v409
        %v422 = vmul.f32 %v368, %v410
        %v423 = vmul.f32 %v369, %v411
        %v424 = vmul.f32 %v370, %v412
        %v425 = vmul.f32 %v371, %v413
        %v426 = vmul.f32 %v372, %v414
        %v427 = vmul.f32 %v373, %v415
        %v428 = vmul.f32 %v374, %v416
        %v429 = vsel %vm375, 16843009, 0
        %v430 = vsel %vm376, 16843009, 0
        %v431 = vsel %vm377, 16843009, 0
        %v432 = vsel %vm378, 16843009, 0
        %v433 = vsel %vm379, 16843009, 0
        %v434 = vsel %vm380, 16843009, 0
        %v435 = vunpack.c.0.s8 %v429
        %v436 = vunpack.c.1.s8 %v429
        %v437 = vunpack.c.0.s8 %v430
        %v438 = vunpack.c.1.s8 %v430
        %v439 = vunpack.c.0.s8 %v431
        %v440 = vunpack.c.1.s8 %v431
        %v441 = vunpack.c.0.s8 %v432
        %v442 = vunpack.c.1.s8 %v432
        %v443 = vunpack.c.0.s8 %v433
        %v444 = vunpack.c.1.s8 %v433
        %v445 = vunpack.c.0.s8 %v434
        %v446 = vunpack.c.1.s8 %v434
        %vm447 = vcmp.ne.s32.totalorder %v435, 0
        %vm448 = vcmp.ne.s32.totalorder %v436, 0
        %vm449 = vcmp.ne.s32.totalorder %v437, 0
        %vm450 = vcmp.ne.s32.totalorder %v438, 0
        %vm451 = vcmp.ne.s32.totalorder %v439, 0
        %vm452 = vcmp.ne.s32.totalorder %v440, 0
        %vm453 = vcmp.ne.s32.totalorder %v441, 0
        %vm454 = vcmp.ne.s32.totalorder %v442, 0
        %vm455 = vcmp.ne.s32.totalorder %v443, 0
        %vm456 = vcmp.ne.s32.totalorder %v444, 0
        %vm457 = vcmp.ne.s32.totalorder %v445, 0
        %vm458 = vcmp.ne.s32.totalorder %v446, 0
        %v459 = vsel %vm447, %v417, 0.0
        %v460 = vsel %vm448, %v418, 0.0
        %v461 = vsel %vm449, %v419, 0.0
        %v462 = vsel %vm450, %v420, 0.0
        %v463 = vsel %vm451, %v421, 0.0
        %v464 = vsel %vm452, %v422, 0.0
        %v465 = vsel %vm453, %v423, 0.0
        %v466 = vsel %vm454, %v424, 0.0
        %v467 = vsel %vm455, %v425, 0.0
        %v468 = vsel %vm456, %v426, 0.0
        %v469 = vsel %vm457, %v427, 0.0
        %v470 = vsel %vm458, %v428, 0.0
        %vm471 = vcmask 793600
        %v472 = vsel %vm471, %v460, 0.0
        %v473 = vadd.f32 %v459, %v472
        %v474 = vadd.f32 %v473, %v461
        %v475 = vsel %vm471, %v462, 0.0
        %v476 = vadd.f32 %v474, %v475
        %v477 = vadd.f32 %v476, %v463
        %v478 = vsel %vm471, %v464, 0.0
        %v479 = vadd.f32 %v477, %v478
        %v480 = vadd.f32 %v479, %v465
        %v481 = vsel %vm471, %v466, 0.0
        %v482 = vadd.f32 %v480, %v481
        %v483 = vadd.f32 %v482, %v467
        %v484 = vsel %vm471, %v468, 0.0
        %v485 = vadd.f32 %v483, %v484
        %vm486 = vcmask 1043456
        %v487 = vsel %vm486, %v469, 0.0
        %v488 = vadd.f32 %v485, %v487
        %vm489 = vcmask 789504
        %v490 = vsel %vm489, %v470, 0.0
        %v491 = vadd.f32 %v488, %v490
        %492 = vadd.xlane.f32.xlu0 %v491
        %v493 = vpop.xlane.xlu0 %492
        %v494 = vrot.slane %v493, 4
        %v495 = vadd.f32 %v493, %v494
        %v496 = vrot.slane %v495, 2
        %v497 = vadd.f32 %v495, %v496
        %v498 = vrot.slane %v497, 1
        %v499 = vadd.f32 %v497, %v498
        %s500 = vtos %v499
        %v501 = vsel %vm447, 1, 0
        %v502 = vsel %vm448, 1, 0
        %v503 = vsel %vm449, 1, 0
        %v504 = vsel %vm450, 1, 0
        %v505 = vsel %vm451, 1, 0
        %v506 = vsel %vm452, 1, 0
        %v507 = vsel %vm453, 1, 0
        %v508 = vsel %vm454, 1, 0
        %v509 = vsel %vm455, 1, 0
        %v510 = vsel %vm456, 1, 0
        %v511 = vsel %vm457, 1, 0
        %v512 = vsel %vm458, 1, 0
        %v513 = vcvt.s32.f32 %v501
        %v514 = vcvt.s32.f32 %v502
        %v515 = vcvt.s32.f32 %v503
        %v516 = vcvt.s32.f32 %v504
        %v517 = vcvt.s32.f32 %v505
        %v518 = vcvt.s32.f32 %v506
        %v519 = vcvt.s32.f32 %v507
        %v520 = vcvt.s32.f32 %v508
        %v521 = vcvt.s32.f32 %v509
        %v522 = vcvt.s32.f32 %v510
        %v523 = vcvt.s32.f32 %v511
        %v524 = vcvt.s32.f32 %v512
        %v525 = vsel %vm471, %v514, 0.0
        %v526 = vadd.f32 %v513, %v525
        %v527 = vadd.f32 %v526, %v515
        %v528 = vsel %vm471, %v516, 0.0
        %v529 = vadd.f32 %v527, %v528
        %v530 = vadd.f32 %v529, %v517
        %v531 = vsel %vm471, %v518, 0.0
        %v532 = vadd.f32 %v530, %v531
        %v533 = vadd.f32 %v532, %v519
        %v534 = vsel %vm471, %v520, 0.0
        %v535 = vadd.f32 %v533, %v534
        %v536 = vadd.f32 %v535, %v521
        %v537 = vsel %vm471, %v522, 0.0
        %v538 = vadd.f32 %v536, %v537
        %v539 = vsel %vm486, %v523, 0.0
        %v540 = vadd.f32 %v538, %v539
        %v541 = vsel %vm489, %v524, 0.0
        %v542 = vadd.f32 %v540, %v541
        %543 = vadd.xlane.f32.xlu0 %v542
        %v544 = vpop.xlane.xlu0 %543
        %v545 = vrot.slane %v544, 4
        %v546 = vadd.f32 %v544, %v545
        %v547 = vrot.slane %v546, 2
        %v548 = vadd.f32 %v546, %v547
        %v549 = vrot.slane %v548, 1
        %v550 = vadd.f32 %v548, %v549
        %s551 = vtos %v550
        %v552 = vsel %vm381, 1, 0
        %v553 = vsel %vm382, 1, 0
        %v554 = vsel %vm383, 1, 0
        %v555 = vsel %vm384, 1, 0
        %v556 = vsel %vm385, 1, 0
        %v557 = vsel %vm386, 1, 0
        %v558 = vsel %vm387, 1, 0
        %v559 = vsel %vm388, 1, 0
        %v560 = vsel %vm389, 1, 0
        %v561 = vsel %vm390, 1, 0
        %v562 = vsel %vm391, 1, 0
        %v563 = vsel %vm392, 1, 0
        %v564 = vcvt.s32.f32 %v552
        %v565 = vcvt.s32.f32 %v553
        %v566 = vcvt.s32.f32 %v554
        %v567 = vcvt.s32.f32 %v555
        %v568 = vcvt.s32.f32 %v556
        %v569 = vcvt.s32.f32 %v557
        %v570 = vcvt.s32.f32 %v558
        %v571 = vcvt.s32.f32 %v559
        %v572 = vcvt.s32.f32 %v560
        %v573 = vcvt.s32.f32 %v561
        %v574 = vcvt.s32.f32 %v562
        %v575 = vcvt.s32.f32 %v563
        %v576 = vsel %vm471, %v565, 0.0
        %v577 = vadd.f32 %v564, %v576
        %v578 = vadd.f32 %v577, %v566
        %v579 = vsel %vm471, %v567, 0.0
        %v580 = vadd.f32 %v578, %v579
        %v581 = vadd.f32 %v580, %v568
        %v582 = vsel %vm471, %v569, 0.0
        %v583 = vadd.f32 %v581, %v582
        %v584 = vadd.f32 %v583, %v570
        %v585 = vsel %vm471, %v571, 0.0
        %v586 = vadd.f32 %v584, %v585
        %v587 = vadd.f32 %v586, %v572
        %v588 = vsel %vm471, %v573, 0.0
        %v589 = vadd.f32 %v587, %v588
        %v590 = vsel %vm486, %v574, 0.0
        %v591 = vadd.f32 %v589, %v590
        %v592 = vsel %vm489, %v575, 0.0
        %v593 = vadd.f32 %v591, %v592
        %594 = vadd.xlane.f32.xlu0 %v593
        %v595 = vpop.xlane.xlu0 %594
        %v596 = vrot.slane %v595, 4
        %v597 = vadd.f32 %v595, %v596
        %v598 = vrot.slane %v597, 2
        %v599 = vadd.f32 %v597, %v598
        %v600 = vrot.slane %v599, 1
        %v601 = vadd.f32 %v599, %v600
        %s602 = vtos %v601
        %v603 = vlaneseq
        %v604 = vand.u32 %v603, 127
        %vm605 = vcmp.eq.s32.totalorder %v604, 0
        %vm606 = vcmp.eq.s32.totalorder %v604, 1
        %vm607 = vcmp.eq.s32.totalorder %v604, 2
        %v608 = vstv %s602
        %v609 = vsel %vm607, %v608, 0.0
        %v610 = vstv %s551
        %v611 = vsel %vm606, %v610, %v609
        %v612 = vstv %s500
        %v613 = vsel %vm605, %v612, %v611
        %614 = vst [vmem:[%s290] sm:$0x1] %v613
        %s615 = sand.u32 %s150, 1
        %s616 = scalar_lea.sflag [#allocation3], %s615
        %s617 = sand.u32 %s150, 1
        %s618 = scalar_lea.vmem [#allocation2], %s617
        // Predicated region
        $region37: #{tpu_custom_call.1} parent=35 // pred_check
          %p619 = pneg %p160
        $region38: #{tpu_custom_call.1} parent=35 // pred_check_branch
          %621 = sbr.rel (%p619) target = $region40
        $region39: #{tpu_custom_call.1} parent=35 // pred_region
          %s623 = ssub.s32 16, 16
          %624 = vsyncadd %s616, %s623
          %s625 = smul.addr %s22, 2
          %s626 = sadd.s32 %s23, %s625
          %s627 = smul.addr %s626, 16
          %s628 = scalar_lea.hbm %s4, %s627
          %s630 = sshll.u32 %s618, 4
          %s631 = int_to_ptr.vmem [resolvable:$true] %s630
          %633 = dma.vmem_to_hbm [thread:$0]  %s631, 16, %s628, %s616
        $region40: #{tpu_custom_call.1} parent=35 // pred_fallthru
          _
      $region36: #{tpu_custom_call.1} parent=5 // pred_fallthru
        _
      %p634 = scmp.le.s32.totalorder 2, %s13
      // Predicated region
      $region41: #{tpu_custom_call.1} parent=5 // pred_check
        %p635 = pneg %p634
      $region42: #{tpu_custom_call.1} parent=5 // pred_check_branch
        %637 = sbr.rel (%p635) target = $region44
      $region43: #{tpu_custom_call.1} parent=5 // pred_region
        %s638 = ssub.s32 %s13, 2
        // Predicated region
        $region45: #{tpu_custom_call.1} parent=43 // pred_check
          %p639 = pneg %p166
        $region46: #{tpu_custom_call.1} parent=43 // pred_check_branch
          %641 = sbr.rel (%p639) target = $region48
        $region47: #{tpu_custom_call.1} parent=43 // pred_region
          %s642 = sand.u32 %s151, 1
          %s643 = scalar_lea.sflag [#allocation3], %s642
          %s644 = sand.u32 %s151, 1
          %s645 = scalar_lea.vmem [#allocation2], %s644
          %646 = dma.done %s643, 16
        $region48: #{tpu_custom_call.1} parent=43 // pred_fallthru
          _
      $region44: #{tpu_custom_call.1} parent=5 // pred_fallthru
        _
    $region6: #{tpu_custom_call.1} parent=1 // loop_footer
      %s17 = sadd.s32 1, %s13
    $region7: #{tpu_custom_call.1} parent=1 // loop_footer_branch
      %12 = sbr.rel target = $region3
    $region8: #{tpu_custom_call.1} parent=1 // loop_exit
      _
    %647 = vsyncpa [#allocation3], 1
    %s648 = scalar_lea.sflag [#allocation3], 1
    %649 = vsyncpa %s648, 1

</llo_original>
